<compile_context>
chip_gen: v6e
topology: v6e:2x2x1
jax: 0.10.0
libtpu: 0.0.40
codegen_flags: <defaults>
</compile_context>

<pallas_src>
import functools

import jax
import jax.numpy as jnp
from jax import lax
from jax.experimental import pallas as pl
from jax.experimental.pallas import tpu as pltpu

_LANE = 128
_FOLD = 512                         # lane width of resident accumulators
_EPS = 1e-6
_TARGET_BLOCK_BYTES = 2 << 20       # ~2 MiB of preds per grid step
_MAX_LANES = 65536                  # lane cap (multiple of _FOLD)
_VMEM_LIMIT = 32 * 1024 * 1024      # safe on v5e/v6e (128 MiB) and v7x (64 MiB)


def _lane_fold(x, width):
    """Pairwise-tree fold of the lane (last) dim of x down to `width`."""
    w = x.shape[-1]
    if w == width:
        return x
    assert w % width == 0
    chunks = [x[:, i:i + width] for i in range(0, w, width)]
    while len(chunks) > 1:
        nxt = [a + b for a, b in zip(chunks[::2], chunks[1::2])]
        if len(chunks) % 2:
            nxt.append(chunks[-1])
        chunks = nxt
    return chunks[0]


def _dice_kernel(preds_ref, labels_ref, tp_ref, den_ref, num_acc, den_acc, *,
                 delta, spatial, tile, tiles_per_chunk, need_mask):
    """Accumulate per-class dice numerator/denominator over spatial tiles."""
    t = pl.program_id(2)

    @pl.when(t == 0)
    def _():
        num_acc[...] = jnp.zeros_like(num_acc)
        den_acc[...] = jnp.zeros_like(den_acc)

    # HBM traffic stays in the caller's dtype; math runs in f32.
    p = preds_ref[0].astype(jnp.float32)                 # (C, TS)
    lbl = labels_ref[0]                                  # (1, TS) int32

    if need_mask:
        # Ragged tail / chunk-rounding overrun: zero the invalid lanes.
        g = pl.program_id(1) * tiles_per_chunk + t       # global tile index
        valid = spatial - g * tile                       # scalar, may be <= 0
        lane = lax.broadcasted_iota(jnp.int32, (1, tile), 1)
        m = lane < valid                                 # (1, TS)
        p = jnp.where(m, p, 0.0)       # also zeroes the (1-delta)*p den term
        lbl = jnp.where(m, lbl, -1)    # -1 never matches a class id

    class_ids = lax.broadcasted_iota(jnp.int32, (p.shape[0], 1), 0)   # (C, 1)
    onehot = (lbl == class_ids).astype(jnp.float32)                   # (C, TS)

    # numerator partial:   onehot * p                     -> tp
    # denominator partial: delta*onehot + (1-delta)*p     -> tp + d*fn + (1-d)*fp
    num_term = onehot * p
    den_term = jnp.float32(delta) * onehot + jnp.float32(1.0 - delta) * p

    # Lane-fold before the accumulator read-modify-write: accumulators are only
    # (C, _FOLD) wide, so per-vreg vld/vst traffic on them is tiny.
    num_acc[...] += _lane_fold(num_term, num_acc.shape[-1])
    den_acc[...] += _lane_fold(den_term, den_acc.shape[-1])

    @pl.when(t == pl.num_programs(2) - 1)
    def _():
        tp_ref[0, 0] = jnp.sum(num_acc[...], axis=1, keepdims=True)   # (C, 1)
        den_ref[0, 0] = jnp.sum(den_acc[...], axis=1, keepdims=True)  # (C, 1)


def _choose_spatial_tile(num_classes, spatial, itemsize):
    """Lane tile so one preds block is ~2 MiB (lane cap 64K, multiple of 512),
    clamped to the 128-rounded spatial size."""
    lanes = _TARGET_BLOCK_BYTES // max(1, num_classes * itemsize)
    lanes = max(_FOLD, min(_MAX_LANES, (lanes // _FOLD) * _FOLD))
    spatial_128 = -(-spatial // _LANE) * _LANE
    return min(lanes, spatial_128)


@functools.partial(jax.jit, static_argnames=("delta",))
def _dice_per_image(preds, labels, *, delta):
    """Returns (1/C) * sum_c (1 - dice_{n,c}) for each image n, shape (N,)."""
    n, c, h, w = preds.shape
    s = h * w
    preds3 = preds.reshape(n, c, s)
    labels3 = labels.astype(jnp.int32).reshape(n, 1, s)

    ts = _choose_spatial_tile(c, s, jnp.dtype(preds.dtype).itemsize)
    fold = _FOLD if ts % _FOLD == 0 else _LANE
    num_tiles = -(-s // ts)

    # Megacore: when N is 1 or odd, chunk the spatial reduction so there are
    # >= 2 (and evenly splittable) parallel grid points.
    if n >= 2 and n % 2 == 0:
        nc = 1
    else:
        nc = max(1, min(2, num_tiles))
    tiles_per_chunk = -(-num_tiles // nc)
    need_mask = (nc * tiles_per_chunk * ts != s)
    last_tile = num_tiles - 1

    def spatial_block(i, cc, t):
        # Clamp so chunk rounding never issues a fully out-of-bounds DMA;
        # the extra steps are masked to zero inside the kernel.
        return (i, 0, jnp.minimum(cc * tiles_per_chunk + t, last_tile))

    part_shape = jax.ShapeDtypeStruct((n, nc, c, 1), jnp.float32)
    tp_parts, den_parts = pl.pallas_call(
        functools.partial(
            _dice_kernel, delta=float(delta), spatial=s, tile=ts,
            tiles_per_chunk=tiles_per_chunk, need_mask=need_mask),
        out_shape=(part_shape, part_shape),
        grid_spec=pltpu.PrefetchScalarGridSpec(
            num_scalar_prefetch=0,
            grid=(n, nc, tiles_per_chunk),
            in_specs=[
                pl.BlockSpec((1, c, ts), spatial_block),
                pl.BlockSpec((1, 1, ts), spatial_block),
            ],
            out_specs=[
                pl.BlockSpec((1, 1, c, 1), lambda i, cc, t: (i, cc, 0, 0)),
                pl.BlockSpec((1, 1, c, 1), lambda i, cc, t: (i, cc, 0, 0)),
            ],
            scratch_shapes=[
                pltpu.VMEM((c, fold), jnp.float32),
                pltpu.VMEM((c, fold), jnp.float32),
            ],
        ),
        compiler_params=pltpu.CompilerParams(
            dimension_semantics=("parallel", "parallel", "arbitrary"),
            vmem_limit_bytes=_VMEM_LIMIT,
        ),
    )(preds3, labels3)

    # Final combine (a few hundred floats): dice division + per-image mean.
    tp = jnp.sum(tp_parts[..., 0], axis=1)        # (N, C)
    den = jnp.sum(den_parts[..., 0], axis=1)      # (N, C)
    dice = (tp + jnp.float32(_EPS)) / (den + jnp.float32(_EPS))
    return jnp.sum(1.0 - dice, axis=1) / jnp.float32(c)


def dice_loss(preds, labels, delta=0.5, aux_weights=(1, 0.4, 0.4)):
    """Pallas equivalent of Dice.forward (handles single tensor or tuple)."""
    if isinstance(preds, (tuple, list)):
        total = jnp.float32(0.0)
        for p, w in zip(preds, aux_weights):
            total = total + jnp.float32(w) * jnp.mean(
                _dice_per_image(p, labels, delta=delta))
        return total
    return jnp.mean(_dice_per_image(preds, labels, delta=delta))


def _dice_ref(preds, labels, delta):
    """Pure-JAX reference mirroring the PyTorch module."""
    num_classes = preds.shape[1]
    onehot = jax.nn.one_hot(labels, num_classes, dtype=preds.dtype)
    onehot = jnp.transpose(onehot, (0, 3, 1, 2))
    tp = jnp.sum(onehot * preds, axis=(2, 3))
    fn = jnp.sum(onehot * (1.0 - preds), axis=(2, 3))
    fp = jnp.sum((1.0 - onehot) * preds, axis=(2, 3))
    dice = (tp + _EPS) / (tp + delta * fn + (1.0 - delta) * fp + _EPS)
    return jnp.mean(jnp.sum(1.0 - dice, axis=-1) / num_classes)


if __name__ == "__main__":
    key = jax.random.PRNGKey(0)
    k1, k2, k3, k4 = jax.random.split(key, 4)

    N, C, H, W = 2, 4, 16, 16
    delta = 0.5
    aux_weights = (1.0, 0.4, 0.4)

    preds = jax.nn.softmax(jax.random.normal(k1, (N, C, H, W), jnp.float32), axis=1)
    labels = jax.random.randint(k2, (N, H, W), 0, C, dtype=jnp.int32)

    # Single-prediction path.
    out_single = dice_loss(preds, labels, delta=delta, aux_weights=aux_weights)
    out_single = jax.block_until_ready(out_single)
    ref_single = _dice_ref(preds, labels, delta)
    assert jnp.allclose(out_single, ref_single, rtol=1e-4, atol=1e-5), (
        out_single, ref_single)

    # Aux (tuple of predictions) path.
    preds_aux = (
        preds,
        jax.nn.softmax(jax.random.normal(k3, (N, C, H, W), jnp.float32), axis=1),
        jax.nn.softmax(jax.random.normal(k4, (N, C, H, W), jnp.float32), axis=1),
    )
    out_aux = dice_loss(preds_aux, labels, delta=delta, aux_weights=aux_weights)
    out_aux = jax.block_until_ready(out_aux)
    ref_aux = sum(w * _dice_ref(p, labels, delta)
                  for p, w in zip(preds_aux, aux_weights))
    assert jnp.allclose(out_aux, ref_aux, rtol=1e-4, atol=1e-5), (out_aux, ref_aux)

    print("KERNEL_OK")
</pallas_src>

<mosaic_0001>
module attributes {stable_mosaic.version = 11 : i64} {
  func.func @_dice_kernel(%arg0: i32, %arg1: i32, %arg2: i32, %arg3: memref<1x4x256xf32, #tpu.memory_space<vmem>>, %arg4: memref<1x1x256xi32, #tpu.memory_space<vmem>>, %arg5: memref<1x1x4x1xf32, #tpu.memory_space<vmem>>, %arg6: memref<1x1x4x1xf32, #tpu.memory_space<vmem>>, %arg7: memref<4x128xf32, #tpu.memory_space<vmem>>, %arg8: memref<4x128xf32, #tpu.memory_space<vmem>>) attributes {dimension_semantics = [#tpu.dimension_semantics<parallel>, #tpu.dimension_semantics<parallel>, #tpu.dimension_semantics<arbitrary>], iteration_bounds = array<i64: 2, 1, 1>, scalar_prefetch = 0 : i64, scratch_operands = 2 : i64, tpu.core_type = #tpu.core_type<tc>, window_params = [{transform_indices = @transform_0, window_bounds = array<i64: 1, 4, 256>}, {transform_indices = @transform_1, window_bounds = array<i64: 1, 1, 256>}, {transform_indices = @transform_2, window_bounds = array<i64: 1, 1, 4, 1>}, {transform_indices = @transform_3, window_bounds = array<i64: 1, 1, 4, 1>}]} {
    %c0_i32 = arith.constant 0 : i32
    %0 = arith.cmpi eq, %arg2, %c0_i32 : i32
    %1 = arith.extui %0 : i1 to i32
    %c0_i32_0 = arith.constant 0 : i32
    %2 = arith.cmpi ne, %1, %c0_i32_0 : i32
    scf.if %2 {
      %cst_17 = arith.constant 0.000000e+00 : f32
      %34 = vector.broadcast %cst_17 : f32 to vector<4x128xf32>
      %c0_18 = arith.constant 0 : index
      %c0_19 = arith.constant 0 : index
      %35 = vector.load %arg7[%c0_18, %c0_19] : memref<4x128xf32, #tpu.memory_space<vmem>>, vector<4x128xf32>
      tpu.vector_store %arg7[%c0_18, %c0_19], %34 {strides = array<i32>} : memref<4x128xf32, #tpu.memory_space<vmem>>, vector<4x128xf32>,
      %cst_20 = arith.constant 0.000000e+00 : f32
      %36 = vector.broadcast %cst_20 : f32 to vector<4x128xf32>
      %c0_21 = arith.constant 0 : index
      %c0_22 = arith.constant 0 : index
      %37 = vector.load %arg8[%c0_21, %c0_22] : memref<4x128xf32, #tpu.memory_space<vmem>>, vector<4x128xf32>
      tpu.vector_store %arg8[%c0_21, %c0_22], %36 {strides = array<i32>} : memref<4x128xf32, #tpu.memory_space<vmem>>, vector<4x128xf32>,
    } else {
    }
    %c0 = arith.constant 0 : index
    %c0_1 = arith.constant 0 : index
    %c0_2 = arith.constant 0 : index
    %3 = vector.load %arg3[%c0, %c0_1, %c0_2] : memref<1x4x256xf32, #tpu.memory_space<vmem>>, vector<1x4x256xf32>
    %4 = vector.shape_cast %3 : vector<1x4x256xf32> to vector<4x256xf32>
    %c0_3 = arith.constant 0 : index
    %c0_4 = arith.constant 0 : index
    %c0_5 = arith.constant 0 : index
    %5 = vector.load %arg4[%c0_3, %c0_4, %c0_5] : memref<1x1x256xi32, #tpu.memory_space<vmem>>, vector<1x1x256xi32>
    %6 = vector.shape_cast %5 : vector<1x1x256xi32> to vector<1x256xi32>
    %7 = tpu.iota {dimensions = array<i32: 0>} : vector<4x1xi32>
    %8 = vector.broadcast %6 : vector<1x256xi32> to vector<4x256xi32>
    %9 = vector.broadcast %7 : vector<4x1xi32> to vector<4x256xi32>
    %10 = arith.cmpi eq, %8, %9 : vector<4x256xi32>
    %11 = arith.extui %10 : vector<4x256xi1> to vector<4x256xi32>
    %12 = arith.sitofp %11 : vector<4x256xi32> to vector<4x256xf32>
    %13 = arith.mulf %12, %4 : vector<4x256xf32>
    %cst = arith.constant 5.000000e-01 : f32
    %14 = vector.broadcast %cst : f32 to vector<4x256xf32>
    %15 = arith.mulf %14, %12 : vector<4x256xf32>
    %cst_6 = arith.constant 5.000000e-01 : f32
    %16 = vector.broadcast %cst_6 : f32 to vector<4x256xf32>
    %17 = arith.mulf %16, %4 : vector<4x256xf32>
    %18 = arith.addf %15, %17 : vector<4x256xf32>
    %c0_7 = arith.constant 0 : index
    %c0_8 = arith.constant 0 : index
    %19 = vector.load %arg7[%c0_7, %c0_8] : memref<4x128xf32, #tpu.memory_space<vmem>>, vector<4x128xf32>
    %20 = vector.extract_strided_slice %13 {offsets = [0, 0], sizes = [4, 128], strides = [1, 1]} : vector<4x256xf32> to vector<4x128xf32>
    %21 = vector.extract_strided_slice %13 {offsets = [0, 128], sizes = [4, 128], strides = [1, 1]} : vector<4x256xf32> to vector<4x128xf32>
    %22 = arith.addf %20, %21 : vector<4x128xf32>
    %23 = arith.addf %19, %22 : vector<4x128xf32>
    %c0_9 = arith.constant 0 : index
    %c0_10 = arith.constant 0 : index
    %24 = vector.load %arg7[%c0_9, %c0_10] : memref<4x128xf32, #tpu.memory_space<vmem>>, vector<4x128xf32>
    tpu.vector_store %arg7[%c0_9, %c0_10], %23 {strides = array<i32>} : memref<4x128xf32, #tpu.memory_space<vmem>>, vector<4x128xf32>,
    %c0_11 = arith.constant 0 : index
    %c0_12 = arith.constant 0 : index
    %25 = vector.load %arg8[%c0_11, %c0_12] : memref<4x128xf32, #tpu.memory_space<vmem>>, vector<4x128xf32>
    %26 = vector.extract_strided_slice %18 {offsets = [0, 0], sizes = [4, 128], strides = [1, 1]} : vector<4x256xf32> to vector<4x128xf32>
    %27 = vector.extract_strided_slice %18 {offsets = [0, 128], sizes = [4, 128], strides = [1, 1]} : vector<4x256xf32> to vector<4x128xf32>
    %28 = arith.addf %26, %27 : vector<4x128xf32>
    %29 = arith.addf %25, %28 : vector<4x128xf32>
    %c0_13 = arith.constant 0 : index
    %c0_14 = arith.constant 0 : index
    %30 = vector.load %arg8[%c0_13, %c0_14] : memref<4x128xf32, #tpu.memory_space<vmem>>, vector<4x128xf32>
    tpu.vector_store %arg8[%c0_13, %c0_14], %29 {strides = array<i32>} : memref<4x128xf32, #tpu.memory_space<vmem>>, vector<4x128xf32>,
    %c0_i32_15 = arith.constant 0 : i32
    %31 = arith.cmpi eq, %arg2, %c0_i32_15 : i32
    %32 = arith.extui %31 : i1 to i32
    %c0_i32_16 = arith.constant 0 : i32
    %33 = arith.cmpi ne, %32, %c0_i32_16 : i32
    scf.if %33 {
      %c0_17 = arith.constant 0 : index
      %c0_18 = arith.constant 0 : index
      %34 = vector.load %arg7[%c0_17, %c0_18] : memref<4x128xf32, #tpu.memory_space<vmem>>, vector<4x128xf32>
      %cst_19 = arith.constant dense<0.000000e+00> : vector<4xf32>
      %35 = vector.multi_reduction <add>, %34, %cst_19 [1] : vector<4x128xf32> to vector<4xf32>
      %36 = vector.shape_cast %35 : vector<4xf32> to vector<4x1xf32>
      %c0_20 = arith.constant 0 : index
      %c0_21 = arith.constant 0 : index
      %c0_22 = arith.constant 0 : index
      %c0_23 = arith.constant 0 : index
      %37 = vector.load %arg5[%c0_20, %c0_21, %c0_22, %c0_23] : memref<1x1x4x1xf32, #tpu.memory_space<vmem>>, vector<1x1x4x1xf32>
      %38 = vector.shape_cast %37 : vector<1x1x4x1xf32> to vector<4x1xf32>
      %39 = vector.shape_cast %36 : vector<4x1xf32> to vector<1x1x4x1xf32>
      tpu.vector_store %arg5[%c0_20, %c0_21, %c0_22, %c0_23], %39 {strides = array<i32>} : memref<1x1x4x1xf32, #tpu.memory_space<vmem>>, vector<1x1x4x1xf32>,
      %c0_24 = arith.constant 0 : index
      %c0_25 = arith.constant 0 : index
      %40 = vector.load %arg8[%c0_24, %c0_25] : memref<4x128xf32, #tpu.memory_space<vmem>>, vector<4x128xf32>
      %cst_26 = arith.constant dense<0.000000e+00> : vector<4xf32>
      %41 = vector.multi_reduction <add>, %40, %cst_26 [1] : vector<4x128xf32> to vector<4xf32>
      %42 = vector.shape_cast %41 : vector<4xf32> to vector<4x1xf32>
      %c0_27 = arith.constant 0 : index
      %c0_28 = arith.constant 0 : index
      %c0_29 = arith.constant 0 : index
      %c0_30 = arith.constant 0 : index
      %43 = vector.load %arg6[%c0_27, %c0_28, %c0_29, %c0_30] : memref<1x1x4x1xf32, #tpu.memory_space<vmem>>, vector<1x1x4x1xf32>
      %44 = vector.shape_cast %43 : vector<1x1x4x1xf32> to vector<4x1xf32>
      %45 = vector.shape_cast %42 : vector<4x1xf32> to vector<1x1x4x1xf32>
      tpu.vector_store %arg6[%c0_27, %c0_28, %c0_29, %c0_30], %45 {strides = array<i32>} : memref<1x1x4x1xf32, #tpu.memory_space<vmem>>, vector<1x1x4x1xf32>,
    } else {
    }
    return
  }
  func.func @transform_0(%arg0: i32, %arg1: i32, %arg2: i32) -> (i32, i32, i32) {
    %c1_i32 = arith.constant 1 : i32
    %0 = arith.muli %arg1, %c1_i32 : i32
    %1 = arith.addi %0, %arg2 : i32
    %c0_i32 = arith.constant 0 : i32
    %2 = arith.minsi %1, %c0_i32 : i32
    %c0_i32_0 = arith.constant 0 : i32
    %c0_i32_1 = arith.constant 0 : i32
    return %arg0, %c0_i32_0, %2 : i32, i32, i32
  }
  func.func @transform_1(%arg0: i32, %arg1: i32, %arg2: i32) -> (i32, i32, i32) {
    %c1_i32 = arith.constant 1 : i32
    %0 = arith.muli %arg1, %c1_i32 : i32
    %1 = arith.addi %0, %arg2 : i32
    %c0_i32 = arith.constant 0 : i32
    %2 = arith.minsi %1, %c0_i32 : i32
    %c0_i32_0 = arith.constant 0 : i32
    %c0_i32_1 = arith.constant 0 : i32
    return %arg0, %c0_i32_0, %2 : i32, i32, i32
  }
  func.func @transform_2(%arg0: i32, %arg1: i32, %arg2: i32) -> (i32, i32, i32, i32) {
    %c0_i32 = arith.constant 0 : i32
    %c0_i32_0 = arith.constant 0 : i32
    %c0_i32_1 = arith.constant 0 : i32
    return %arg0, %arg1, %c0_i32, %c0_i32_0 : i32, i32, i32, i32
  }
  func.func @transform_3(%arg0: i32, %arg1: i32, %arg2: i32) -> (i32, i32, i32, i32) {
    %c0_i32 = arith.constant 0 : i32
    %c0_i32_0 = arith.constant 0 : i32
    %c0_i32_1 = arith.constant 0 : i32
    return %arg0, %arg1, %c0_i32, %c0_i32_0 : i32, i32, i32, i32
  }
}

</mosaic_0001>

<llo_original>
// kernel: _dice_per_image.1
$region0: #{_dice_per_image.1}
  #allocation0 [shape = 'u32[]', space=smem, size = 0x4, offset = 0x4, fixed_abs, tag = 'smem constant byte address 0x4 - core index']
  #allocation1 [shape = 'u32[144,128]{1,0:T(1,128)}', space=vmem, size = 0x12000, scoped, tag = 'internal scratch']
  #allocation2 [shape = 'f32[4,128]{1,0:T(4,128)}', space=vmem, size = 0x800, scoped, tag = 'scratch operand']
  #allocation3 [shape = 'f32[4,128]{1,0:T(4,128)}', space=vmem, size = 0x800, scoped, tag = 'scratch operand']
  %s0 = inlined_call_operand.vmem [shape: f32[2,4,256], index: 0, kind: input, shape index: {}]
  %s1 = inlined_call_operand.vmem [shape: s32[2,1,256], index: 1, kind: input, shape index: {}]
  %s2 = inlined_call_operand.vmem [shape: f32[2,1,4,1], index: 2, kind: output, shape index: {0}]
  %s3 = inlined_call_operand.vmem [shape: f32[2,1,4,1], index: 3, kind: output, shape index: {1}]
  %4 = xla_tuple %s2, %s3
  %s5 = sld [smem:[#allocation0]]
  $region57: #{_dice_per_image.1} parent=0
    _
  %s7 = ssub.s32 1, %s5
  %s8 = scalar_select 0, %s7, %s5
  loop: start=0, step=1, limit=4
  $region2: #{_dice_per_image.1} parent=0 // loop_pre_header
    _
  $region3: #{_dice_per_image.1} parent=0 // loop_header
    %s10 = sphi 0, %s14
    %p11 = scmp.ge.s32.totalorder %s10, 4
    %s17 = sphi 0, %s36
    %s18 = sphi 0, %s32
    %s19 = sphi 0, %s28
    %s20 = sphi 0, %s17
    %s21 = sphi 0, %s18
    %s22 = sphi 0, %s19
    %s23 = sphi 0, %s20
    %s24 = sphi 0, %s21
    %s25 = sphi 0, %s22
    %s47 = sphi 0, %s49
    %s50 = sphi 0, %s47
    %s51 = sphi 0, %s50
    %s67 = sphi 0, %s51
    %s81 = sphi 0, %s83
    %s84 = sphi 0, %s81
    %s85 = sphi 0, %s84
    %s101 = sphi 0, %s85
    %s109 = sphi 0, %s111
    %s112 = sphi 0, %s109
    %s113 = sphi 0, %s112
    %s129 = sphi 0, %s113
    %s137 = sphi 0, %s139
    %s140 = sphi 0, %s137
    %s141 = sphi 0, %s140
    %s157 = sphi 0, %s141
  $region4: #{_dice_per_image.1} parent=0 // loop_header_branch
    %13 = sbr.rel (%p11) target = $region8
  $region5: #{_dice_per_image.1} parent=0 // loop_body
    %s15 = ssub.s32 %s10, 1
    %s16 = ssub.s32 %s10, 2
    %s26 = sadd.s32 1, %s19
    %p27 = scmp.ge.s32.totalorder %s26, 1
    %s28 = scalar_select %p27, 0, %s26
    %s29 = sadd.s32 1, %s18
    %s30 = scalar_select %p27, %s29, %s18
    %p31 = scmp.ge.s32.totalorder %s30, 1
    %s32 = scalar_select %p31, 0, %s30
    %s33 = sadd.s32 1, %s17
    %s34 = scalar_select %p31, %s33, %s17
    %p35 = scmp.ge.s32.totalorder %s34, 2
    %s36 = scalar_select %p35, 0, %s34
    %s37 = sadd.s32 %s18, %s19
    %p38 = scmp.lt.s32.totalorder %s37, 0
    %s39 = scalar_select %p38, %s37, 0
    %s40 = sadd.s32 %s32, %s28
    %p41 = scmp.lt.s32.totalorder %s40, 0
    %s42 = scalar_select %p41, %s40, 0
    %s43 = ssub.s32 %s17, %s36
    %s44 = ssub.s32 %s39, %s42
    %s45 = sor.u32 %s43, %s44
    %p46 = scmp.eq.s32.totalorder %s45, 0
    %s48 = sadd.s32 %s47, 1
    %s49 = scalar_select %p46, %s47, %s48
    %p52 = pneg %p46
    %p53 = scmp.eq.s32.totalorder %s10, 1
    %p54 = por %p52, %p53
    %p55 = scmp.ne.s32.totalorder %s47, %s50
    %p56 = scmp.eq.s32.totalorder %s10, 0
    %p57 = por %p55, %p56
    %p58 = scmp.ne.s32.totalorder %s47, %s50
    %p59 = scmp.eq.s32.totalorder %s15, 1
    %p60 = por %p58, %p59
    %p61 = scmp.ne.s32.totalorder %s50, %s51
    %p62 = scmp.eq.s32.totalorder %s15, 0
    %p63 = por %p61, %p62
    %p64 = scmp.ne.s32.totalorder %s50, %s51
    %p65 = scmp.eq.s32.totalorder %s16, 1
    %p66 = por %p64, %p65
    %p68 = scmp.ne.s32.totalorder %s51, %s67
    %p69 = scmp.eq.s32.totalorder %s16, 0
    %p70 = por %p68, %p69
    %s71 = sadd.s32 %s18, %s19
    %p72 = scmp.lt.s32.totalorder %s71, 0
    %s73 = scalar_select %p72, %s71, 0
    %s74 = sadd.s32 %s32, %s28
    %p75 = scmp.lt.s32.totalorder %s74, 0
    %s76 = scalar_select %p75, %s74, 0
    %s77 = ssub.s32 %s17, %s36
    %s78 = ssub.s32 %s73, %s76
    %s79 = sor.u32 %s77, %s78
    %p80 = scmp.eq.s32.totalorder %s79, 0
    %s82 = sadd.s32 %s81, 1
    %s83 = scalar_select %p80, %s81, %s82
    %p86 = pneg %p80
    %p87 = scmp.eq.s32.totalorder %s10, 1
    %p88 = por %p86, %p87
    %p89 = scmp.ne.s32.totalorder %s81, %s84
    %p90 = scmp.eq.s32.totalorder %s10, 0
    %p91 = por %p89, %p90
    %p92 = scmp.ne.s32.totalorder %s81, %s84
    %p93 = scmp.eq.s32.totalorder %s15, 1
    %p94 = por %p92, %p93
    %p95 = scmp.ne.s32.totalorder %s84, %s85
    %p96 = scmp.eq.s32.totalorder %s15, 0
    %p97 = por %p95, %p96
    %p98 = scmp.ne.s32.totalorder %s84, %s85
    %p99 = scmp.eq.s32.totalorder %s16, 1
    %p100 = por %p98, %p99
    %p102 = scmp.ne.s32.totalorder %s85, %s101
    %p103 = scmp.eq.s32.totalorder %s16, 0
    %p104 = por %p102, %p103
    %s105 = ssub.s32 %s17, %s36
    %s106 = ssub.s32 %s18, %s32
    %s107 = sor.u32 %s105, %s106
    %p108 = scmp.eq.s32.totalorder %s107, 0
    %s110 = sadd.s32 %s109, 1
    %s111 = scalar_select %p108, %s109, %s110
    %p114 = pneg %p108
    %p115 = scmp.eq.s32.totalorder %s10, 1
    %p116 = por %p114, %p115
    %p117 = scmp.ne.s32.totalorder %s109, %s112
    %p118 = scmp.eq.s32.totalorder %s10, 0
    %p119 = por %p117, %p118
    %p120 = scmp.ne.s32.totalorder %s109, %s112
    %p121 = scmp.eq.s32.totalorder %s15, 1
    %p122 = por %p120, %p121
    %p123 = scmp.ne.s32.totalorder %s112, %s113
    %p124 = scmp.eq.s32.totalorder %s15, 0
    %p125 = por %p123, %p124
    %p126 = scmp.ne.s32.totalorder %s112, %s113
    %p127 = scmp.eq.s32.totalorder %s16, 1
    %p128 = por %p126, %p127
    %p130 = scmp.ne.s32.totalorder %s113, %s129
    %p131 = scmp.eq.s32.totalorder %s16, 0
    %p132 = por %p130, %p131
    %s133 = ssub.s32 %s17, %s36
    %s134 = ssub.s32 %s18, %s32
    %s135 = sor.u32 %s133, %s134
    %p136 = scmp.eq.s32.totalorder %s135, 0
    %s138 = sadd.s32 %s137, 1
    %s139 = scalar_select %p136, %s137, %s138
    %p142 = pneg %p136
    %p143 = scmp.eq.s32.totalorder %s10, 1
    %p144 = por %p142, %p143
    %p145 = scmp.ne.s32.totalorder %s137, %s140
    %p146 = scmp.eq.s32.totalorder %s10, 0
    %p147 = por %p145, %p146
    %p148 = scmp.ne.s32.totalorder %s137, %s140
    %p149 = scmp.eq.s32.totalorder %s15, 1
    %p150 = por %p148, %p149
    %p151 = scmp.ne.s32.totalorder %s140, %s141
    %p152 = scmp.eq.s32.totalorder %s15, 0
    %p153 = por %p151, %p152
    %p154 = scmp.ne.s32.totalorder %s140, %s141
    %p155 = scmp.eq.s32.totalorder %s16, 1
    %p156 = por %p154, %p155
    %p158 = scmp.ne.s32.totalorder %s141, %s157
    %p159 = scmp.eq.s32.totalorder %s16, 0
    %p160 = por %p158, %p159
    %p161 = scmp.le.s32.totalorder 1, %s10
    %p162 = scmp.lt.s32.totalorder %s10, 3
    %p163 = pnand %p161, %p162
    %p164 = pneg %p163
    // Predicated region
    $region9: #{_dice_per_image.1} parent=5 // pred_check
      _
    $region10: #{_dice_per_image.1} parent=5 // pred_check_branch
      %166 = sbr.rel (%p163) target = $region12
    $region11: #{_dice_per_image.1} parent=5 // pred_region
      %s167 = ssub.s32 %s10, 1
    $region12: #{_dice_per_image.1} parent=5 // pred_fallthru
      _
    %p168 = scmp.lt.s32.totalorder %s10, 2
    // Predicated region
    $region13: #{_dice_per_image.1} parent=5 // pred_check
      %p169 = pneg %p168
    $region14: #{_dice_per_image.1} parent=5 // pred_check_branch
      %171 = sbr.rel (%p169) target = $region16
    $region15: #{_dice_per_image.1} parent=5 // pred_region
      // Predicated region
      $region17: #{_dice_per_image.1} parent=15 // pred_check
        %p172 = pneg %p57
      $region18: #{_dice_per_image.1} parent=15 // pred_check_branch
        %174 = sbr.rel (%p172) target = $region20
      $region19: #{_dice_per_image.1} parent=15 // pred_region
        %s175 = sadd.s32 %s18, %s19
        %p176 = scmp.lt.s32.totalorder %s175, 0
        %s177 = scalar_select %p176, %s175, 0
        %s178 = smul.u32 2, %s177
        %p179 = scmp.lt.s32.totalorder %s17, 1
        %s180 = scalar_select %p179, %s17, 1
        %p181 = scmp.lt.s32.totalorder %s178, 1
        %s182 = scalar_select %p181, %s178, 1
        %s183 = smul.addr %s180, 2
        %s184 = sadd.s32 %s182, %s183
        %s185 = smul.addr %s184, 4
        %s186 = scalar_lea.vmem %s0, %s185
        %s187 = sadd.s32 %s18, %s19
        %p188 = scmp.lt.s32.totalorder %s187, 0
        %s189 = scalar_select %p188, %s187, 0
        %s190 = smul.u32 2, %s189
      $region20: #{_dice_per_image.1} parent=15 // pred_fallthru
        _
      // Predicated region
      $region21: #{_dice_per_image.1} parent=15 // pred_check
        %p191 = pneg %p91
      $region22: #{_dice_per_image.1} parent=15 // pred_check_branch
        %193 = sbr.rel (%p191) target = $region24
      $region23: #{_dice_per_image.1} parent=15 // pred_region
        %s194 = sadd.s32 %s18, %s19
        %p195 = scmp.lt.s32.totalorder %s194, 0
        %s196 = scalar_select %p195, %s194, 0
        %s197 = smul.u32 2, %s196
        %p198 = scmp.lt.s32.totalorder %s17, 1
        %s199 = scalar_select %p198, %s17, 1
        %p200 = scmp.lt.s32.totalorder %s197, 1
        %s201 = scalar_select %p200, %s197, 1
        %s202 = smul.addr %s199, 2
        %s203 = sadd.s32 %s201, %s202
        %s204 = scalar_lea.vmem %s1, %s203
        %s205 = sadd.s32 %s18, %s19
        %p206 = scmp.lt.s32.totalorder %s205, 0
        %s207 = scalar_select %p206, %s205, 0
        %s208 = smul.u32 2, %s207
      $region24: #{_dice_per_image.1} parent=15 // pred_fallthru
        _
    $region16: #{_dice_per_image.1} parent=5 // pred_fallthru
      _
    %p209 = scmp.le.s32.totalorder 1, %s10
    %p210 = scmp.lt.s32.totalorder %s10, 3
    %p211 = pnand %p209, %p210
    %p212 = pneg %p211
    // Predicated region
    $region25: #{_dice_per_image.1} parent=5 // pred_check
      _
    $region26: #{_dice_per_image.1} parent=5 // pred_check_branch
      %214 = sbr.rel (%p211) target = $region28
    $region27: #{_dice_per_image.1} parent=5 // pred_region
      %s215 = ssub.s32 %s10, 1
      %s216 = sadd.s32 %s21, %s22
      %p217 = scmp.lt.s32.totalorder %s216, 0
      %s218 = scalar_select %p217, %s216, 0
      %s219 = smul.u32 2, %s218
      %p220 = scmp.lt.s32.totalorder %s20, 1
      %s221 = scalar_select %p220, %s20, 1
      %p222 = scmp.lt.s32.totalorder %s219, 1
      %s223 = scalar_select %p222, %s219, 1
      %s224 = smul.addr %s221, 2
      %s225 = sadd.s32 %s223, %s224
      %s226 = smul.addr %s225, 4
      %s227 = scalar_lea.vmem %s0, %s226
      %p228 = pneg %p63
      %p229 = pneg %p60
      %s230 = sadd.s32 %s21, %s22
      %p231 = scmp.lt.s32.totalorder %s230, 0
      %s232 = scalar_select %p231, %s230, 0
      %s233 = smul.u32 2, %s232
      %p234 = scmp.lt.s32.totalorder %s20, 1
      %s235 = scalar_select %p234, %s20, 1
      %p236 = scmp.lt.s32.totalorder %s233, 1
      %s237 = scalar_select %p236, %s233, 1
      %s238 = smul.addr %s235, 2
      %s239 = sadd.s32 %s237, %s238
      %s240 = scalar_lea.vmem %s1, %s239
      %p241 = pneg %p97
      %p242 = pneg %p94
      %p243 = pneg %p125
      %p244 = pneg %p122
      %p245 = scmp.lt.s32.totalorder %s20, 1
      %s246 = scalar_select %p245, %s20, 1
      %p247 = scmp.lt.s32.totalorder %s21, 0
      %s248 = scalar_select %p247, %s21, 0
      %s249 = sadd.s32 %s248, %s246
      %s250 = smul.addr %s249, 4
      %s251 = scalar_lea.vmem %s2, %s250
      %p252 = pneg %p153
      %p253 = pneg %p150
      %p254 = scmp.lt.s32.totalorder %s20, 1
      %s255 = scalar_select %p254, %s20, 1
      %p256 = scmp.lt.s32.totalorder %s21, 0
      %s257 = scalar_select %p256, %s21, 0
      %s258 = sadd.s32 %s257, %s255
      %s259 = smul.addr %s258, 4
      %s260 = scalar_lea.vmem %s3, %s259
      %s261 = sadd.s32 %s21, %s22
      %p262 = scmp.lt.s32.totalorder %s261, 0
      %s263 = scalar_select %p262, %s261, 0
      %s264 = smul.u32 2, %s263
      %p265 = scmp.lt.s32.totalorder %s20, 1
      %s266 = scalar_select %p265, %s20, 1
      %p267 = scmp.lt.s32.totalorder %s264, 1
      %s268 = scalar_select %p267, %s264, 1
      %s269 = smul.addr %s266, 2
      %s270 = sadd.s32 %s268, %s269
      %s271 = smul.addr %s270, 4
      %s272 = scalar_lea.vmem %s0, %s271
      %s273 = sadd.s32 %s21, %s22
      %p274 = scmp.lt.s32.totalorder %s273, 0
      %s275 = scalar_select %p274, %s273, 0
      %s276 = smul.u32 2, %s275
      %s277 = sadd.s32 %s21, %s22
      %p278 = scmp.lt.s32.totalorder %s277, 0
      %s279 = scalar_select %p278, %s277, 0
      %s280 = smul.u32 2, %s279
      %p281 = scmp.lt.s32.totalorder %s20, 1
      %s282 = scalar_select %p281, %s20, 1
      %p283 = scmp.lt.s32.totalorder %s280, 1
      %s284 = scalar_select %p283, %s280, 1
      %s285 = smul.addr %s282, 2
      %s286 = sadd.s32 %s284, %s285
      %s287 = scalar_lea.vmem %s1, %s286
      %s288 = sadd.s32 %s21, %s22
      %p289 = scmp.lt.s32.totalorder %s288, 0
      %s290 = scalar_select %p289, %s288, 0
      %s291 = smul.u32 2, %s290
      %p292 = scmp.lt.s32.totalorder %s20, 1
      %s293 = scalar_select %p292, %s20, 1
      %p294 = scmp.lt.s32.totalorder %s21, 0
      %s295 = scalar_select %p294, %s21, 0
      %s296 = sadd.s32 %s295, %s293
      %s297 = smul.addr %s296, 4
      %s298 = scalar_lea.vmem %s2, %s297
      %p299 = scmp.lt.s32.totalorder %s20, 1
      %s300 = scalar_select %p299, %s20, 1
      %p301 = scmp.lt.s32.totalorder %s21, 0
      %s302 = scalar_select %p301, %s21, 0
      %s303 = sadd.s32 %s302, %s300
      %s304 = smul.addr %s303, 4
      %s305 = scalar_lea.vmem %s3, %s304
      %p306 = scmp.eq.s32.totalorder %s22, 0
      // Predicated region
      $region29: #{_dice_per_image.1} parent=27 // pred_check
        %p307 = pneg %p306
      $region30: #{_dice_per_image.1} parent=27 // pred_check_branch
        %309 = sbr.rel (%p307) target = $region32
      $region31: #{_dice_per_image.1} parent=27 // pred_region
        %310 = vst [vmem:[#allocation2] sm:$0xf] 0.0
        %311 = vst [vmem:[#allocation3] sm:$0xf] 0.0
      $region32: #{_dice_per_image.1} parent=27 // pred_fallthru
        _
      %v312 = vld [vmem:[%s272] sm:$0xff]
      %v313 = vld [vmem:[%s287] sm:$0x3]
      %v314 = vlaneseq
      %v315 = vshrl.u32 %v314, 7
      %v316 = vlaneseq
      %v317 = vshrl.u32 %v316, 7
      %v318 = vsub.s32 0, %v317
      %v319 = vrot.slane %v313, %v318
      %v320 = vlaneseq
      %v321 = vshrl.u32 %v320, 7
      %v322 = vsub.s32 1, %v321
      %v323 = vrot.slane %v313, %v322
      %vm324 = vcmp.eq.s32.totalorder %v319, %v315
      %vm325 = vcmp.eq.s32.totalorder %v323, %v315
      %v326 = vsel %vm324, 1, 0
      %v327 = vsel %vm325, 1, 0
      %v328 = vcvt.s32.f32 %v326
      %v329 = vcvt.s32.f32 %v327
      %v331 = vcombine.high %v312, %v312
      %v333 = vmul.f32 %v328, %v312
      %v334 = vmul.f32 %v329, %v331
      %v335 = vmul.f32 %v328, 0.5
      %v336 = vmul.f32 %v329, 0.5
      %v337 = vmul.f32 %v312, 0.5
      %v339 = vcombine.high %v337, %v337
      %v341 = vadd.f32 %v335, %v337
      %v342 = vadd.f32 %v336, %v339
      %v343 = vld [vmem:[#allocation2] sm:$0xf]
      %v344 = vadd.f32 %v333, %v334
      %v345 = vadd.f32 %v343, %v344
      %346 = vst [vmem:[#allocation2] sm:$0xf] %v345
      %v347 = vld [vmem:[#allocation3] sm:$0xf]
      %v348 = vadd.f32 %v341, %v342
      %v349 = vadd.f32 %v347, %v348
      %350 = vst [vmem:[#allocation3] sm:$0xf] %v349
      // Predicated region
      $region33: #{_dice_per_image.1} parent=27 // pred_check
        %p351 = pneg %p306
      $region34: #{_dice_per_image.1} parent=27 // pred_check_branch
        %353 = sbr.rel (%p351) target = $region36
      $region35: #{_dice_per_image.1} parent=27 // pred_region
        %v354 = vld [vmem:[#allocation2] sm:$0xf]
        %vm355 = vcmask 1043456
        %v356 = vsel %vm355, %v354, 0.0
        %357 = vadd.xlane.f32.xlu0 %v356
        %v358 = vpop.xlane.xlu0 %357
        %vm359 = vcmask 3072
        %360 = vst.msk [vmem:[%s298] sm:$0xf] %vm359, %v358
        %v361 = vld [vmem:[#allocation3] sm:$0xf]
        %v362 = vsel %vm355, %v361, 0.0
        %363 = vadd.xlane.f32.xlu0 %v362
        %v364 = vpop.xlane.xlu0 %363
        %365 = vst.msk [vmem:[%s305] sm:$0xf] %vm359, %v364
      $region36: #{_dice_per_image.1} parent=27 // pred_fallthru
        _
      %p366 = scmp.lt.s32.totalorder %s20, 1
      %s367 = scalar_select %p366, %s20, 1
      %p368 = scmp.lt.s32.totalorder %s21, 0
      %s369 = scalar_select %p368, %s21, 0
      %s370 = sadd.s32 %s369, %s367
      %s371 = smul.addr %s370, 4
      %s372 = scalar_lea.vmem %s2, %s371
      %p373 = scmp.lt.s32.totalorder %s20, 1
      %s374 = scalar_select %p373, %s20, 1
      %p375 = scmp.lt.s32.totalorder %s21, 0
      %s376 = scalar_select %p375, %s21, 0
      %s377 = sadd.s32 %s376, %s374
      %s378 = smul.addr %s377, 4
      %s379 = scalar_lea.vmem %s3, %s378
      // Predicated region
      $region37: #{_dice_per_image.1} parent=27 // pred_check
        %p380 = pneg %p122
      $region38: #{_dice_per_image.1} parent=27 // pred_check_branch
        %382 = sbr.rel (%p380) target = $region40
      $region39: #{_dice_per_image.1} parent=27 // pred_region
        _
      $region40: #{_dice_per_image.1} parent=27 // pred_fallthru
        _
      // Predicated region
      $region41: #{_dice_per_image.1} parent=27 // pred_check
        %p383 = pneg %p150
      $region42: #{_dice_per_image.1} parent=27 // pred_check_branch
        %385 = sbr.rel (%p383) target = $region44
      $region43: #{_dice_per_image.1} parent=27 // pred_region
        _
      $region44: #{_dice_per_image.1} parent=27 // pred_fallthru
        _
    $region28: #{_dice_per_image.1} parent=5 // pred_fallthru
      _
    %p386 = scmp.le.s32.totalorder 2, %s10
    // Predicated region
    $region45: #{_dice_per_image.1} parent=5 // pred_check
      %p387 = pneg %p386
    $region46: #{_dice_per_image.1} parent=5 // pred_check_branch
      %389 = sbr.rel (%p387) target = $region48
    $region47: #{_dice_per_image.1} parent=5 // pred_region
      %s390 = ssub.s32 %s10, 2
      // Predicated region
      $region49: #{_dice_per_image.1} parent=47 // pred_check
        %p391 = pneg %p128
      $region50: #{_dice_per_image.1} parent=47 // pred_check_branch
        %393 = sbr.rel (%p391) target = $region52
      $region51: #{_dice_per_image.1} parent=47 // pred_region
        %p394 = scmp.lt.s32.totalorder %s23, 1
        %s395 = scalar_select %p394, %s23, 1
        %p396 = scmp.lt.s32.totalorder %s24, 0
        %s397 = scalar_select %p396, %s24, 0
        %s398 = sadd.s32 %s397, %s395
        %s399 = smul.addr %s398, 4
        %s400 = scalar_lea.vmem %s2, %s399
      $region52: #{_dice_per_image.1} parent=47 // pred_fallthru
        _
      // Predicated region
      $region53: #{_dice_per_image.1} parent=47 // pred_check
        %p401 = pneg %p156
      $region54: #{_dice_per_image.1} parent=47 // pred_check_branch
        %403 = sbr.rel (%p401) target = $region56
      $region55: #{_dice_per_image.1} parent=47 // pred_region
        %p404 = scmp.lt.s32.totalorder %s23, 1
        %s405 = scalar_select %p404, %s23, 1
        %p406 = scmp.lt.s32.totalorder %s24, 0
        %s407 = scalar_select %p406, %s24, 0
        %s408 = sadd.s32 %s407, %s405
        %s409 = smul.addr %s408, 4
        %s410 = scalar_lea.vmem %s3, %s409
      $region56: #{_dice_per_image.1} parent=47 // pred_fallthru
        _
    $region48: #{_dice_per_image.1} parent=5 // pred_fallthru
      _
  $region6: #{_dice_per_image.1} parent=0 // loop_footer
    %s14 = sadd.s32 1, %s10
  $region7: #{_dice_per_image.1} parent=0 // loop_footer_branch
    %9 = sbr.rel target = $region3
  $region8: #{_dice_per_image.1} parent=0 // loop_exit
    _

</llo_original>
